<compile_context>
chip_gen: v7x
topology: tpu7x:2x2x1
jax: 0.10.0
libtpu: 0.0.40
codegen_flags: <defaults>
</compile_context>

<pallas_src>
import jax
import jax.numpy as jnp
from jax.experimental import pallas as pl
from jax.experimental.pallas import tpu as pltpu

OUT_NUM = 1  # undefined global in the original SCNN.py; assumed 1


# ----------------------------------------------------------------------------
# Fused kernel factory.  One grid step = one batch element, full network.
# Refs: (x_ref, *weight_refs, o_ref).  All shapes/static config closed over.
# ----------------------------------------------------------------------------
def _make_fused_kernel(layer_cfgs, L):
    def kernel(*refs):
        x_ref = refs[0]
        o_ref = refs[-1]
        w_refs = refs[1:-1]

        x = x_ref[0].astype(jnp.float32)                    # (C_in, L)
        i = 0
        for cfg in layer_cfgs:
            # ---- bottleneck 1x1 conv (bias-free): plain matmul ----
            if cfg["bottleneck"]:
                wb = w_refs[i][...]                         # (nf, C_prev) bf16
                i += 1
                x = jnp.dot(wb, x.astype(jnp.bfloat16),
                            preferred_element_type=jnp.float32)   # (nf, L)

            # ---- main conv (BN scale pre-folded into weights) ----
            w2 = w_refs[i][...]                             # (ch, K*C_mid) bf16
            i += 1
            bb = w_refs[i][...]                             # (ch, 1) f32
            i += 1

            K, pad_l, pad_r = cfg["K"], cfg["pad_l"], cfg["pad_r"]
            C = x.shape[0]
            xb = x.astype(jnp.bfloat16)

            # zero 'same' padding, built in VMEM (no HBM pad op)
            pieces = []
            if pad_l:
                pieces.append(jnp.zeros((C, pad_l), jnp.bfloat16))
            pieces.append(xb)
            if pad_r:
                pieces.append(jnp.zeros((C, pad_r), jnp.bfloat16))
            xp = jnp.concatenate(pieces, axis=1) if len(pieces) > 1 else xb

            # im2col: stack the K shifted views along the contraction axis,
            # then ONE wide MXU matmul (contraction dim K*C) replaces K taps.
            if K > 1:
                xcol = jnp.concatenate([xp[:, k:k + L] for k in range(K)],
                                       axis=0)              # (K*C, L)
            else:
                xcol = xp
            y = jnp.dot(w2, xcol,
                        preferred_element_type=jnp.float32)  # (ch, L) f32

            # BN bias + ReLU in f32
            x = jnp.maximum(y + bb, 0.0)

        # ---- head: GAP1d(1) -> Linear -> log_softmax(dim=1) ----
        pooled = jnp.mean(x, axis=1, keepdims=True)          # (ch, 1)
        pooled_row = jnp.transpose(pooled).astype(jnp.bfloat16)   # (1, ch)
        wfc = w_refs[i][...]                                 # (ch, CP) bf16
        bfc = w_refs[i + 1][...]                             # (1, CP) f32 (-1e30 on pad lanes)
        logits = jnp.dot(pooled_row, wfc,
                         preferred_element_type=jnp.float32) + bfc   # (1, CP)
        m = jnp.max(logits, axis=1, keepdims=True)
        lse = m + jnp.log(jnp.sum(jnp.exp(logits - m), axis=1, keepdims=True))
        o_ref[0] = (logits - lse).astype(o_ref.dtype)        # lane-dense store
    return kernel


# ----------------------------------------------------------------------------
# Wrapper: weight preprocessing (BN fold, im2col weight reshape, bf16 cast,
# FC padding to 128 lanes) + one pallas_call for the whole forward pass.
# ----------------------------------------------------------------------------
def _build_kernel_inputs(params, c_in):
    weights = []
    layer_cfgs = []
    c_prev = c_in
    for mod in params["modules"]:
        cfg = {}
        if mod["bottleneck_w"] is not None:
            wb = mod["bottleneck_w"][:, :, 0].astype(jnp.bfloat16)   # (nf, c_prev)
            weights.append(wb)
            cfg["bottleneck"] = True
            c_mid = wb.shape[0]
        else:
            cfg["bottleneck"] = False
            c_mid = c_prev

        w = mod["conv_w"]                                    # (ch, c_mid, K)
        ch, _, K = w.shape
        # fold BN scale into the conv weights (per output channel)
        w_folded = w * mod["bn_scale"][:, None, None]
        # im2col weight: row index k*C_mid + c  <->  xcol row ordering
        w2 = jnp.transpose(w_folded, (0, 2, 1)).reshape(ch, K * c_mid)
        weights.append(w2.astype(jnp.bfloat16))
        weights.append(mod["bn_bias"].reshape(ch, 1).astype(jnp.float32))
        cfg.update(K=K, pad_l=K // 2, pad_r=K - 1 - K // 2)
        layer_cfgs.append(cfg)
        c_prev = ch

    fc_w = params["fc_w"]                                    # (c_out, ch)
    fc_b = params["fc_b"]                                    # (c_out,)
    c_out = fc_w.shape[0]
    CP = ((c_out + 127) // 128) * 128                        # lane-dense classes
    wfc = jnp.zeros((c_prev, CP), jnp.float32).at[:, :c_out].set(fc_w.T)
    bfc = jnp.full((1, CP), -1e30, jnp.float32).at[0, :c_out].set(fc_b)
    weights.append(wfc.astype(jnp.bfloat16))
    weights.append(bfc)
    return weights, layer_cfgs, CP, c_out


def scnn_fc_forward(params, x):
    N, C_in, L = x.shape
    weights, layer_cfgs, CP, c_out = _build_kernel_inputs(params, C_in)
    kernel = _make_fused_kernel(layer_cfgs, L)

    in_specs = [pl.BlockSpec((1, C_in, L), lambda n: (n, 0, 0))]
    for w in weights:
        # weights are tiny: whole-array blocks, resident across all grid steps
        in_specs.append(pl.BlockSpec(tuple(w.shape),
                                     (lambda n, nd=w.ndim: (0,) * nd)))

    # TODO(synk): for production-scale L the (C, L) activations / im2col slabs
    # should be tiled over L (v7x has only 64 MiB physical VMEM); fine for the
    # small shapes used here.
    out = pl.pallas_call(
        kernel,
        out_shape=jax.ShapeDtypeStruct((N, 1, CP), jnp.float32),
        grid=(N,),
        in_specs=in_specs,
        out_specs=pl.BlockSpec((1, 1, CP), lambda n: (n, 0, 0)),
        compiler_params=pltpu.CompilerParams(
            dimension_semantics=("parallel",)),    # batch -> 2 TCs on v7x
    )(x, *weights)
    return out[:, 0, :c_out]


# ----------------------------------------------------------------------------
# Parameter construction (deterministic, synthetic).
# ----------------------------------------------------------------------------
def init_params(key, c_in, c_out, nf=47, depth=4, kernel=39):
    params = {"modules": []}
    ch = nf * OUT_NUM
    for d in range(depth):
        ni = c_in if d == 0 else ch
        use_bottleneck = ni > 1
        key, k1, k2 = jax.random.split(key, 3)
        mod = {}
        if use_bottleneck:
            mod["bottleneck_w"] = (jax.random.normal(k1, (nf, ni, 1), jnp.float32)
                                   * (1.0 / jnp.sqrt(ni)))
            conv_in = nf
        else:
            mod["bottleneck_w"] = None
            conv_in = ni
        mod["conv_w"] = (jax.random.normal(k2, (ch, conv_in, kernel), jnp.float32)
                         * (1.0 / jnp.sqrt(conv_in * kernel)))
        # BatchNorm1d defaults (eval): gamma=1, beta=0, mean=0, var=1, eps=1e-5
        gamma = jnp.ones((ch,), jnp.float32)
        beta = jnp.zeros((ch,), jnp.float32)
        rmean = jnp.zeros((ch,), jnp.float32)
        rvar = jnp.ones((ch,), jnp.float32)
        s = gamma / jnp.sqrt(rvar + 1e-5)
        mod["bn_scale"] = s
        mod["bn_bias"] = beta - rmean * s
        params["modules"].append(mod)
    key, kf1, kf2 = jax.random.split(key, 3)
    params["fc_w"] = jax.random.normal(kf1, (c_out, ch), jnp.float32) * (1.0 / jnp.sqrt(ch))
    params["fc_b"] = jax.random.normal(kf2, (c_out,), jnp.float32) * 0.01
    return params


# ----------------------------------------------------------------------------
# Pure-JAX reference (f32, tap-by-tap) for a sanity check against the kernel.
# ----------------------------------------------------------------------------
def _conv_same_ref(x, w):
    _, _, K = w.shape
    _, _, L = x.shape
    pad_l = K // 2
    pad_r = K - 1 - pad_l
    xp = jnp.pad(x, ((0, 0), (0, 0), (pad_l, pad_r)))
    y = 0.0
    for k in range(K):
        y = y + jnp.einsum('oc,ncl->nol', w[:, :, k], xp[:, :, k:k + L])
    return y


def scnn_fc_reference(params, x):
    for mod in params["modules"]:
        if mod["bottleneck_w"] is not None:
            x = _conv_same_ref(x, mod["bottleneck_w"])
        y = _conv_same_ref(x, mod["conv_w"])
        x = jnp.maximum(y * mod["bn_scale"][None, :, None]
                        + mod["bn_bias"][None, :, None], 0.0)
    pooled = jnp.mean(x, axis=2)
    logits = pooled @ params["fc_w"].T + params["fc_b"]
    return jax.nn.log_softmax(logits, axis=1)


if __name__ == "__main__":
    key = jax.random.PRNGKey(0)
    kx, kp = jax.random.split(key)

    # small shapes consistent with the module: x is (batch, c_in, seq_len)
    N, c_in, L = 2, 4, 32
    c_out, nf, depth, kernel_size = 5, 16, 2, 9

    x = jax.random.normal(kx, (N, c_in, L), jnp.float32)
    params = init_params(kp, c_in, c_out, nf=nf, depth=depth, kernel=kernel_size)

    fwd = jax.jit(scnn_fc_forward)
    out = jax.block_until_ready(fwd(params, x))
    ref = scnn_fc_reference(params, x)

    assert out.shape == (N, c_out)
    assert bool(jnp.all(jnp.isfinite(out)))
    # loose tolerance: kernel matmuls use bf16 operands with f32 accumulation
    assert float(jnp.max(jnp.abs(out - ref))) < 0.1
    print("KERNEL_OK")
</pallas_src>

<mosaic_0001>
module attributes {stable_mosaic.version = 11 : i64} {
  func.func @kernel(%arg0: i32, %arg1: memref<1x4x32xf32, #tpu.memory_space<vmem>>, %arg2: memref<16x4xbf16, #tpu.memory_space<vmem>>, %arg3: memref<16x144xbf16, #tpu.memory_space<vmem>>, %arg4: memref<16x1xf32, #tpu.memory_space<vmem>>, %arg5: memref<16x16xbf16, #tpu.memory_space<vmem>>, %arg6: memref<16x144xbf16, #tpu.memory_space<vmem>>, %arg7: memref<16x1xf32, #tpu.memory_space<vmem>>, %arg8: memref<16x128xbf16, #tpu.memory_space<vmem>>, %arg9: memref<1x128xf32, #tpu.memory_space<vmem>>, %arg10: memref<1x1x128xf32, #tpu.memory_space<vmem>>) attributes {dimension_semantics = [#tpu.dimension_semantics<parallel>], iteration_bounds = array<i64: 2>, scalar_prefetch = 0 : i64, scratch_operands = 0 : i64, tpu.core_type = #tpu.core_type<tc>, window_params = [{transform_indices = @transform_0, window_bounds = array<i64: 1, 4, 32>}, {pipeline_mode = #tpu.pipeline_mode<synchronous>, transform_indices = @transform_1, window_bounds = array<i64: 16, 4>}, {pipeline_mode = #tpu.pipeline_mode<synchronous>, transform_indices = @transform_2, window_bounds = array<i64: 16, 144>}, {pipeline_mode = #tpu.pipeline_mode<synchronous>, transform_indices = @transform_3, window_bounds = array<i64: 16, 1>}, {pipeline_mode = #tpu.pipeline_mode<synchronous>, transform_indices = @transform_4, window_bounds = array<i64: 16, 16>}, {pipeline_mode = #tpu.pipeline_mode<synchronous>, transform_indices = @transform_5, window_bounds = array<i64: 16, 144>}, {pipeline_mode = #tpu.pipeline_mode<synchronous>, transform_indices = @transform_6, window_bounds = array<i64: 16, 1>}, {pipeline_mode = #tpu.pipeline_mode<synchronous>, transform_indices = @transform_7, window_bounds = array<i64: 16, 128>}, {pipeline_mode = #tpu.pipeline_mode<synchronous>, transform_indices = @transform_8, window_bounds = array<i64: 1, 128>}, {transform_indices = @transform_9, window_bounds = array<i64: 1, 1, 128>}]} {
    %c0 = arith.constant 0 : index
    %c0_0 = arith.constant 0 : index
    %c0_1 = arith.constant 0 : index
    %0 = vector.load %arg1[%c0, %c0_0, %c0_1] : memref<1x4x32xf32, #tpu.memory_space<vmem>>, vector<1x4x32xf32>
    %1 = vector.shape_cast %0 : vector<1x4x32xf32> to vector<4x32xf32>
    %c0_2 = arith.constant 0 : index
    %c0_3 = arith.constant 0 : index
    %2 = vector.load %arg2[%c0_2, %c0_3] : memref<16x4xbf16, #tpu.memory_space<vmem>>, vector<16x4xbf16>
    %3 = arith.truncf %1 : vector<4x32xf32> to vector<4x32xbf16>
    %cst = arith.constant dense<0.000000e+00> : vector<16x32xf32>
    %4 = tpu.matmul %2, %3, %cst {dimension_numbers = #tpu.dot_dimension_numbers<[1], [0], [0], [1], [0, 0, 1, 1], [], []>} : vector<16x4xbf16>, vector<4x32xbf16>, vector<16x32xf32> -> vector<16x32xf32>
    %c0_4 = arith.constant 0 : index
    %c0_5 = arith.constant 0 : index
    %5 = vector.load %arg3[%c0_4, %c0_5] : memref<16x144xbf16, #tpu.memory_space<vmem>>, vector<16x144xbf16>
    %c0_6 = arith.constant 0 : index
    %c0_7 = arith.constant 0 : index
    %6 = vector.load %arg4[%c0_6, %c0_7] : memref<16x1xf32, #tpu.memory_space<vmem>>, vector<16x1xf32>
    %7 = arith.truncf %4 : vector<16x32xf32> to vector<16x32xbf16>
    %cst_8 = arith.constant 0.000000e+00 : bf16
    %8 = vector.broadcast %cst_8 : bf16 to vector<16x4xbf16>
    %cst_9 = arith.constant 0.000000e+00 : bf16
    %9 = vector.broadcast %cst_9 : bf16 to vector<16x4xbf16>
    %10 = tpu.concatenate %8, %7, %9 in 1 : vector<16x4xbf16>, vector<16x32xbf16>, vector<16x4xbf16> -> vector<16x40xbf16>
    %11 = vector.extract_strided_slice %10 {offsets = [0, 0], sizes = [16, 32], strides = [1, 1]} : vector<16x40xbf16> to vector<16x32xbf16>
    %12 = vector.extract_strided_slice %10 {offsets = [0, 1], sizes = [16, 32], strides = [1, 1]} : vector<16x40xbf16> to vector<16x32xbf16>
    %13 = vector.extract_strided_slice %10 {offsets = [0, 2], sizes = [16, 32], strides = [1, 1]} : vector<16x40xbf16> to vector<16x32xbf16>
    %14 = vector.extract_strided_slice %10 {offsets = [0, 3], sizes = [16, 32], strides = [1, 1]} : vector<16x40xbf16> to vector<16x32xbf16>
    %15 = vector.extract_strided_slice %10 {offsets = [0, 4], sizes = [16, 32], strides = [1, 1]} : vector<16x40xbf16> to vector<16x32xbf16>
    %16 = vector.extract_strided_slice %10 {offsets = [0, 5], sizes = [16, 32], strides = [1, 1]} : vector<16x40xbf16> to vector<16x32xbf16>
    %17 = vector.extract_strided_slice %10 {offsets = [0, 6], sizes = [16, 32], strides = [1, 1]} : vector<16x40xbf16> to vector<16x32xbf16>
    %18 = vector.extract_strided_slice %10 {offsets = [0, 7], sizes = [16, 32], strides = [1, 1]} : vector<16x40xbf16> to vector<16x32xbf16>
    %19 = vector.extract_strided_slice %10 {offsets = [0, 8], sizes = [16, 32], strides = [1, 1]} : vector<16x40xbf16> to vector<16x32xbf16>
    %20 = tpu.concatenate %11, %12, %13, %14, %15, %16, %17, %18, %19 in 0 : vector<16x32xbf16>, vector<16x32xbf16>, vector<16x32xbf16>, vector<16x32xbf16>, vector<16x32xbf16>, vector<16x32xbf16>, vector<16x32xbf16>, vector<16x32xbf16>, vector<16x32xbf16> -> vector<144x32xbf16>
    %cst_10 = arith.constant dense<0.000000e+00> : vector<16x32xf32>
    %21 = tpu.matmul %5, %20, %cst_10 {dimension_numbers = #tpu.dot_dimension_numbers<[1], [0], [0], [1], [0, 0, 1, 1], [], []>} : vector<16x144xbf16>, vector<144x32xbf16>, vector<16x32xf32> -> vector<16x32xf32>
    %22 = vector.broadcast %6 : vector<16x1xf32> to vector<16x32xf32>
    %23 = arith.addf %21, %22 : vector<16x32xf32>
    %cst_11 = arith.constant 0.000000e+00 : f32
    %24 = vector.broadcast %cst_11 : f32 to vector<16x32xf32>
    %25 = arith.maximumf %23, %24 : vector<16x32xf32>
    %c0_12 = arith.constant 0 : index
    %c0_13 = arith.constant 0 : index
    %26 = vector.load %arg5[%c0_12, %c0_13] : memref<16x16xbf16, #tpu.memory_space<vmem>>, vector<16x16xbf16>
    %27 = arith.truncf %25 : vector<16x32xf32> to vector<16x32xbf16>
    %cst_14 = arith.constant dense<0.000000e+00> : vector<16x32xf32>
    %28 = tpu.matmul %26, %27, %cst_14 {dimension_numbers = #tpu.dot_dimension_numbers<[1], [0], [0], [1], [0, 0, 1, 1], [], []>} : vector<16x16xbf16>, vector<16x32xbf16>, vector<16x32xf32> -> vector<16x32xf32>
    %c0_15 = arith.constant 0 : index
    %c0_16 = arith.constant 0 : index
    %29 = vector.load %arg6[%c0_15, %c0_16] : memref<16x144xbf16, #tpu.memory_space<vmem>>, vector<16x144xbf16>
    %c0_17 = arith.constant 0 : index
    %c0_18 = arith.constant 0 : index
    %30 = vector.load %arg7[%c0_17, %c0_18] : memref<16x1xf32, #tpu.memory_space<vmem>>, vector<16x1xf32>
    %31 = arith.truncf %28 : vector<16x32xf32> to vector<16x32xbf16>
    %cst_19 = arith.constant 0.000000e+00 : bf16
    %32 = vector.broadcast %cst_19 : bf16 to vector<16x4xbf16>
    %cst_20 = arith.constant 0.000000e+00 : bf16
    %33 = vector.broadcast %cst_20 : bf16 to vector<16x4xbf16>
    %34 = tpu.concatenate %32, %31, %33 in 1 : vector<16x4xbf16>, vector<16x32xbf16>, vector<16x4xbf16> -> vector<16x40xbf16>
    %35 = vector.extract_strided_slice %34 {offsets = [0, 0], sizes = [16, 32], strides = [1, 1]} : vector<16x40xbf16> to vector<16x32xbf16>
    %36 = vector.extract_strided_slice %34 {offsets = [0, 1], sizes = [16, 32], strides = [1, 1]} : vector<16x40xbf16> to vector<16x32xbf16>
    %37 = vector.extract_strided_slice %34 {offsets = [0, 2], sizes = [16, 32], strides = [1, 1]} : vector<16x40xbf16> to vector<16x32xbf16>
    %38 = vector.extract_strided_slice %34 {offsets = [0, 3], sizes = [16, 32], strides = [1, 1]} : vector<16x40xbf16> to vector<16x32xbf16>
    %39 = vector.extract_strided_slice %34 {offsets = [0, 4], sizes = [16, 32], strides = [1, 1]} : vector<16x40xbf16> to vector<16x32xbf16>
    %40 = vector.extract_strided_slice %34 {offsets = [0, 5], sizes = [16, 32], strides = [1, 1]} : vector<16x40xbf16> to vector<16x32xbf16>
    %41 = vector.extract_strided_slice %34 {offsets = [0, 6], sizes = [16, 32], strides = [1, 1]} : vector<16x40xbf16> to vector<16x32xbf16>
    %42 = vector.extract_strided_slice %34 {offsets = [0, 7], sizes = [16, 32], strides = [1, 1]} : vector<16x40xbf16> to vector<16x32xbf16>
    %43 = vector.extract_strided_slice %34 {offsets = [0, 8], sizes = [16, 32], strides = [1, 1]} : vector<16x40xbf16> to vector<16x32xbf16>
    %44 = tpu.concatenate %35, %36, %37, %38, %39, %40, %41, %42, %43 in 0 : vector<16x32xbf16>, vector<16x32xbf16>, vector<16x32xbf16>, vector<16x32xbf16>, vector<16x32xbf16>, vector<16x32xbf16>, vector<16x32xbf16>, vector<16x32xbf16>, vector<16x32xbf16> -> vector<144x32xbf16>
    %cst_21 = arith.constant dense<0.000000e+00> : vector<16x32xf32>
    %45 = tpu.matmul %29, %44, %cst_21 {dimension_numbers = #tpu.dot_dimension_numbers<[1], [0], [0], [1], [0, 0, 1, 1], [], []>} : vector<16x144xbf16>, vector<144x32xbf16>, vector<16x32xf32> -> vector<16x32xf32>
    %46 = vector.broadcast %30 : vector<16x1xf32> to vector<16x32xf32>
    %47 = arith.addf %45, %46 : vector<16x32xf32>
    %cst_22 = arith.constant 0.000000e+00 : f32
    %48 = vector.broadcast %cst_22 : f32 to vector<16x32xf32>
    %49 = arith.maximumf %47, %48 : vector<16x32xf32>
    %cst_23 = arith.constant dense<0.000000e+00> : vector<16xf32>
    %50 = vector.multi_reduction <add>, %49, %cst_23 [1] : vector<16x32xf32> to vector<16xf32>
    %51 = vector.shape_cast %50 : vector<16xf32> to vector<16x1xf32>
    %cst_24 = arith.constant 3.200000e+01 : f32
    %52 = vector.broadcast %cst_24 : f32 to vector<16x1xf32>
    %53 = arith.divf %51, %52 : vector<16x1xf32>
    %54 = tpu.transpose %53, [1, 0] : vector<16x1xf32> -> vector<1x16xf32>
    %55 = arith.truncf %54 : vector<1x16xf32> to vector<1x16xbf16>
    %c0_25 = arith.constant 0 : index
    %c0_26 = arith.constant 0 : index
    %56 = vector.load %arg8[%c0_25, %c0_26] : memref<16x128xbf16, #tpu.memory_space<vmem>>, vector<16x128xbf16>
    %c0_27 = arith.constant 0 : index
    %c0_28 = arith.constant 0 : index
    %57 = vector.load %arg9[%c0_27, %c0_28] : memref<1x128xf32, #tpu.memory_space<vmem>>, vector<1x128xf32>
    %cst_29 = arith.constant dense<0.000000e+00> : vector<1x128xf32>
    %58 = tpu.matmul %55, %56, %cst_29 {dimension_numbers = #tpu.dot_dimension_numbers<[1], [0], [0], [1], [0, 0, 1, 1], [], []>} : vector<1x16xbf16>, vector<16x128xbf16>, vector<1x128xf32> -> vector<1x128xf32>
    %59 = arith.addf %58, %57 : vector<1x128xf32>
    %cst_30 = arith.constant dense<0xFF800000> : vector<1xf32>
    %60 = vector.multi_reduction <maximumf>, %59, %cst_30 [1] : vector<1x128xf32> to vector<1xf32>
    %61 = vector.shape_cast %60 : vector<1xf32> to vector<1x1xf32>
    %62 = vector.broadcast %61 : vector<1x1xf32> to vector<1x128xf32>
    %63 = arith.subf %59, %62 : vector<1x128xf32>
    %64 = math.exp %63 : vector<1x128xf32>
    %cst_31 = arith.constant dense<0.000000e+00> : vector<1xf32>
    %65 = vector.multi_reduction <add>, %64, %cst_31 [1] : vector<1x128xf32> to vector<1xf32>
    %66 = vector.shape_cast %65 : vector<1xf32> to vector<1x1xf32>
    %67 = math.log %66 : vector<1x1xf32>
    %68 = arith.addf %61, %67 : vector<1x1xf32>
    %69 = vector.broadcast %68 : vector<1x1xf32> to vector<1x128xf32>
    %70 = arith.subf %59, %69 : vector<1x128xf32>
    %c0_32 = arith.constant 0 : index
    %c0_33 = arith.constant 0 : index
    %c0_34 = arith.constant 0 : index
    %71 = vector.load %arg10[%c0_32, %c0_33, %c0_34] : memref<1x1x128xf32, #tpu.memory_space<vmem>>, vector<1x1x128xf32>
    %72 = vector.shape_cast %71 : vector<1x1x128xf32> to vector<1x128xf32>
    %73 = vector.shape_cast %70 : vector<1x128xf32> to vector<1x1x128xf32>
    tpu.vector_store %arg10[%c0_32, %c0_33, %c0_34], %73 {strides = array<i32>} : memref<1x1x128xf32, #tpu.memory_space<vmem>>, vector<1x1x128xf32>,
    return
  }
  func.func @transform_0(%arg0: i32) -> (i32, i32, i32) {
    %c0_i32 = arith.constant 0 : i32
    %c0_i32_0 = arith.constant 0 : i32
    %c0_i32_1 = arith.constant 0 : i32
    return %arg0, %c0_i32, %c0_i32_0 : i32, i32, i32
  }
  func.func @transform_1(%arg0: i32) -> (i32, i32) {
    %c0_i32 = arith.constant 0 : i32
    %c0_i32_0 = arith.constant 0 : i32
    %c0_i32_1 = arith.constant 0 : i32
    return %c0_i32, %c0_i32_0 : i32, i32
  }
  func.func @transform_2(%arg0: i32) -> (i32, i32) {
    %c0_i32 = arith.constant 0 : i32
    %c0_i32_0 = arith.constant 0 : i32
    %c0_i32_1 = arith.constant 0 : i32
    return %c0_i32, %c0_i32_0 : i32, i32
  }
  func.func @transform_3(%arg0: i32) -> (i32, i32) {
    %c0_i32 = arith.constant 0 : i32
    %c0_i32_0 = arith.constant 0 : i32
    %c0_i32_1 = arith.constant 0 : i32
    return %c0_i32, %c0_i32_0 : i32, i32
  }
  func.func @transform_4(%arg0: i32) -> (i32, i32) {
    %c0_i32 = arith.constant 0 : i32
    %c0_i32_0 = arith.constant 0 : i32
    %c0_i32_1 = arith.constant 0 : i32
    return %c0_i32, %c0_i32_0 : i32, i32
  }
  func.func @transform_5(%arg0: i32) -> (i32, i32) {
    %c0_i32 = arith.constant 0 : i32
    %c0_i32_0 = arith.constant 0 : i32
    %c0_i32_1 = arith.constant 0 : i32
    return %c0_i32, %c0_i32_0 : i32, i32
  }
  func.func @transform_6(%arg0: i32) -> (i32, i32) {
    %c0_i32 = arith.constant 0 : i32
    %c0_i32_0 = arith.constant 0 : i32
    %c0_i32_1 = arith.constant 0 : i32
    return %c0_i32, %c0_i32_0 : i32, i32
  }
  func.func @transform_7(%arg0: i32) -> (i32, i32) {
    %c0_i32 = arith.constant 0 : i32
    %c0_i32_0 = arith.constant 0 : i32
    %c0_i32_1 = arith.constant 0 : i32
    return %c0_i32, %c0_i32_0 : i32, i32
  }
  func.func @transform_8(%arg0: i32) -> (i32, i32) {
    %c0_i32 = arith.constant 0 : i32
    %c0_i32_0 = arith.constant 0 : i32
    %c0_i32_1 = arith.constant 0 : i32
    return %c0_i32, %c0_i32_0 : i32, i32
  }
  func.func @transform_9(%arg0: i32) -> (i32, i32, i32) {
    %c0_i32 = arith.constant 0 : i32
    %c0_i32_0 = arith.constant 0 : i32
    %c0_i32_1 = arith.constant 0 : i32
    return %arg0, %c0_i32, %c0_i32_0 : i32, i32, i32
  }
}

</mosaic_0001>

<llo_original>
// kernel: scnn_fc_forward.1
$region0: #{scnn_fc_forward.1}
  #allocation0 [shape = 'u32[]', space=smem, size = 0x4, offset = 0x4, fixed_abs, tag = 'smem constant byte address 0x4 - core index']
  #allocation1 [shape = 'u32[144,128]{1,0:T(1,128)}', space=vmem, size = 0x12000, scoped, tag = 'internal scratch']
  %s0 = inlined_call_operand.vmem [shape: f32[2,4,32], index: 0, kind: input, shape index: {}]
  %s1 = inlined_call_operand.vmem [shape: bf16[16,4], index: 1, kind: input, shape index: {}]
  %s2 = inlined_call_operand.vmem [shape: bf16[16,144], index: 2, kind: input, shape index: {}]
  %s3 = inlined_call_operand.vmem [shape: f32[16,1], index: 3, kind: input, shape index: {}]
  %s4 = inlined_call_operand.vmem [shape: bf16[16,16], index: 4, kind: input, shape index: {}]
  %s5 = inlined_call_operand.vmem [shape: bf16[16,144], index: 5, kind: input, shape index: {}]
  %s6 = inlined_call_operand.vmem [shape: f32[16,1], index: 6, kind: input, shape index: {}]
  %s7 = inlined_call_operand.vmem [shape: bf16[16,128], index: 7, kind: input, shape index: {}]
  %s8 = inlined_call_operand.vmem [shape: f32[1,128], index: 8, kind: input, shape index: {}]
  %s9 = inlined_call_operand.hbm [shape: f32[2,1,128], index: 9, kind: output, shape index: {}]
  %s10 = sld [smem:[#allocation0]]
  $region69: #{scnn_fc_forward.1} parent=0
    _
  %s12 = ssub.s32 1, %s10
  %s13 = scalar_select 0, %s12, %s10
  $region1: #{scnn_fc_forward.1} parent=0
    #allocation2 [shape = 'u8[1024]{0}', space=vmem, size = 0x400, scoped, tag = 'output window, operand 0']
    #allocation3 [shape = 's32[2]{0}', space=sflag, size = 0x8, scoped, tag = 'scoped memory for scnn_fc_forward.1']
    %14 = vsyncpa [#allocation3], 0
    %s15 = scalar_lea.sflag [#allocation3], 1
    %16 = vsyncpa %s15, 0
    loop: start=0, step=1, limit=4
    $region2: #{scnn_fc_forward.1} parent=1 // loop_pre_header
      _
    $region3: #{scnn_fc_forward.1} parent=1 // loop_header
      %s18 = sphi 0, %s22
      %p19 = scmp.ge.s32.totalorder %s18, 4
      %s28 = sphi 0, %s30
      %s31 = sphi 0, %s28
      %s32 = sphi 0, %s31
      %s48 = sphi 0, %s32
      %s52 = sphi 0, %s52
      %s54 = sphi 0, %s52
      %s55 = sphi 0, %s54
      %s69 = sphi 0, %s55
      %s73 = sphi 0, %s73
      %s75 = sphi 0, %s73
      %s76 = sphi 0, %s75
      %s90 = sphi 0, %s76
      %s94 = sphi 0, %s94
      %s96 = sphi 0, %s94
      %s97 = sphi 0, %s96
      %s111 = sphi 0, %s97
      %s115 = sphi 0, %s115
      %s117 = sphi 0, %s115
      %s118 = sphi 0, %s117
      %s132 = sphi 0, %s118
      %s136 = sphi 0, %s136
      %s138 = sphi 0, %s136
      %s139 = sphi 0, %s138
      %s153 = sphi 0, %s139
      %s157 = sphi 0, %s157
      %s159 = sphi 0, %s157
      %s160 = sphi 0, %s159
      %s174 = sphi 0, %s160
      %s178 = sphi 0, %s178
      %s180 = sphi 0, %s178
      %s181 = sphi 0, %s180
      %s195 = sphi 0, %s181
      %s199 = sphi 0, %s199
      %s201 = sphi 0, %s199
      %s202 = sphi 0, %s201
      %s216 = sphi 0, %s202
      %s222 = sphi 0, %s224
      %s225 = sphi 0, %s222
      %s226 = sphi 0, %s225
      %s242 = sphi 0, %s226
    $region4: #{scnn_fc_forward.1} parent=1 // loop_header_branch
      %21 = sbr.rel (%p19) target = $region8
    $region5: #{scnn_fc_forward.1} parent=1 // loop_body
      %s23 = ssub.s32 %s18, 1
      %s24 = ssub.s32 %s18, 2
      %s25 = sadd.s32 %s18, 1
      %s26 = ssub.s32 %s18, %s25
      %p27 = scmp.eq.s32.totalorder %s26, 0
      %s29 = sadd.s32 %s28, 1
      %s30 = scalar_select %p27, %s28, %s29
      %p33 = pneg %p27
      %p34 = scmp.eq.s32.totalorder %s18, 1
      %p35 = por %p33, %p34
      %p36 = scmp.ne.s32.totalorder %s28, %s31
      %p37 = scmp.eq.s32.totalorder %s18, 0
      %p38 = por %p36, %p37
      %p39 = scmp.ne.s32.totalorder %s28, %s31
      %p40 = scmp.eq.s32.totalorder %s23, 1
      %p41 = por %p39, %p40
      %p42 = scmp.ne.s32.totalorder %s31, %s32
      %p43 = scmp.eq.s32.totalorder %s23, 0
      %p44 = por %p42, %p43
      %p45 = scmp.ne.s32.totalorder %s31, %s32
      %p46 = scmp.eq.s32.totalorder %s24, 1
      %p47 = por %p45, %p46
      %p49 = scmp.ne.s32.totalorder %s32, %s48
      %p50 = scmp.eq.s32.totalorder %s24, 0
      %p51 = por %p49, %p50
      %s53 = sadd.s32 %s52, 1
      %p56 = scmp.eq.s32.totalorder %s18, 1
      %p57 = scmp.ne.s32.totalorder %s52, %s54
      %p58 = scmp.eq.s32.totalorder %s18, 0
      %p59 = por %p57, %p58
      %p60 = scmp.ne.s32.totalorder %s52, %s54
      %p61 = scmp.eq.s32.totalorder %s23, 1
      %p62 = por %p60, %p61
      %p63 = scmp.ne.s32.totalorder %s54, %s55
      %p64 = scmp.eq.s32.totalorder %s23, 0
      %p65 = por %p63, %p64
      %p66 = scmp.ne.s32.totalorder %s54, %s55
      %p67 = scmp.eq.s32.totalorder %s24, 1
      %p68 = por %p66, %p67
      %p70 = scmp.ne.s32.totalorder %s55, %s69
      %p71 = scmp.eq.s32.totalorder %s24, 0
      %p72 = por %p70, %p71
      %s74 = sadd.s32 %s73, 1
      %p77 = scmp.eq.s32.totalorder %s18, 1
      %p78 = scmp.ne.s32.totalorder %s73, %s75
      %p79 = scmp.eq.s32.totalorder %s18, 0
      %p80 = por %p78, %p79
      %p81 = scmp.ne.s32.totalorder %s73, %s75
      %p82 = scmp.eq.s32.totalorder %s23, 1
      %p83 = por %p81, %p82
      %p84 = scmp.ne.s32.totalorder %s75, %s76
      %p85 = scmp.eq.s32.totalorder %s23, 0
      %p86 = por %p84, %p85
      %p87 = scmp.ne.s32.totalorder %s75, %s76
      %p88 = scmp.eq.s32.totalorder %s24, 1
      %p89 = por %p87, %p88
      %p91 = scmp.ne.s32.totalorder %s76, %s90
      %p92 = scmp.eq.s32.totalorder %s24, 0
      %p93 = por %p91, %p92
      %s95 = sadd.s32 %s94, 1
      %p98 = scmp.eq.s32.totalorder %s18, 1
      %p99 = scmp.ne.s32.totalorder %s94, %s96
      %p100 = scmp.eq.s32.totalorder %s18, 0
      %p101 = por %p99, %p100
      %p102 = scmp.ne.s32.totalorder %s94, %s96
      %p103 = scmp.eq.s32.totalorder %s23, 1
      %p104 = por %p102, %p103
      %p105 = scmp.ne.s32.totalorder %s96, %s97
      %p106 = scmp.eq.s32.totalorder %s23, 0
      %p107 = por %p105, %p106
      %p108 = scmp.ne.s32.totalorder %s96, %s97
      %p109 = scmp.eq.s32.totalorder %s24, 1
      %p110 = por %p108, %p109
      %p112 = scmp.ne.s32.totalorder %s97, %s111
      %p113 = scmp.eq.s32.totalorder %s24, 0
      %p114 = por %p112, %p113
      %s116 = sadd.s32 %s115, 1
      %p119 = scmp.eq.s32.totalorder %s18, 1
      %p120 = scmp.ne.s32.totalorder %s115, %s117
      %p121 = scmp.eq.s32.totalorder %s18, 0
      %p122 = por %p120, %p121
      %p123 = scmp.ne.s32.totalorder %s115, %s117
      %p124 = scmp.eq.s32.totalorder %s23, 1
      %p125 = por %p123, %p124
      %p126 = scmp.ne.s32.totalorder %s117, %s118
      %p127 = scmp.eq.s32.totalorder %s23, 0
      %p128 = por %p126, %p127
      %p129 = scmp.ne.s32.totalorder %s117, %s118
      %p130 = scmp.eq.s32.totalorder %s24, 1
      %p131 = por %p129, %p130
      %p133 = scmp.ne.s32.totalorder %s118, %s132
      %p134 = scmp.eq.s32.totalorder %s24, 0
      %p135 = por %p133, %p134
      %s137 = sadd.s32 %s136, 1
      %p140 = scmp.eq.s32.totalorder %s18, 1
      %p141 = scmp.ne.s32.totalorder %s136, %s138
      %p142 = scmp.eq.s32.totalorder %s18, 0
      %p143 = por %p141, %p142
      %p144 = scmp.ne.s32.totalorder %s136, %s138
      %p145 = scmp.eq.s32.totalorder %s23, 1
      %p146 = por %p144, %p145
      %p147 = scmp.ne.s32.totalorder %s138, %s139
      %p148 = scmp.eq.s32.totalorder %s23, 0
      %p149 = por %p147, %p148
      %p150 = scmp.ne.s32.totalorder %s138, %s139
      %p151 = scmp.eq.s32.totalorder %s24, 1
      %p152 = por %p150, %p151
      %p154 = scmp.ne.s32.totalorder %s139, %s153
      %p155 = scmp.eq.s32.totalorder %s24, 0
      %p156 = por %p154, %p155
      %s158 = sadd.s32 %s157, 1
      %p161 = scmp.eq.s32.totalorder %s18, 1
      %p162 = scmp.ne.s32.totalorder %s157, %s159
      %p163 = scmp.eq.s32.totalorder %s18, 0
      %p164 = por %p162, %p163
      %p165 = scmp.ne.s32.totalorder %s157, %s159
      %p166 = scmp.eq.s32.totalorder %s23, 1
      %p167 = por %p165, %p166
      %p168 = scmp.ne.s32.totalorder %s159, %s160
      %p169 = scmp.eq.s32.totalorder %s23, 0
      %p170 = por %p168, %p169
      %p171 = scmp.ne.s32.totalorder %s159, %s160
      %p172 = scmp.eq.s32.totalorder %s24, 1
      %p173 = por %p171, %p172
      %p175 = scmp.ne.s32.totalorder %s160, %s174
      %p176 = scmp.eq.s32.totalorder %s24, 0
      %p177 = por %p175, %p176
      %s179 = sadd.s32 %s178, 1
      %p182 = scmp.eq.s32.totalorder %s18, 1
      %p183 = scmp.ne.s32.totalorder %s178, %s180
      %p184 = scmp.eq.s32.totalorder %s18, 0
      %p185 = por %p183, %p184
      %p186 = scmp.ne.s32.totalorder %s178, %s180
      %p187 = scmp.eq.s32.totalorder %s23, 1
      %p188 = por %p186, %p187
      %p189 = scmp.ne.s32.totalorder %s180, %s181
      %p190 = scmp.eq.s32.totalorder %s23, 0
      %p191 = por %p189, %p190
      %p192 = scmp.ne.s32.totalorder %s180, %s181
      %p193 = scmp.eq.s32.totalorder %s24, 1
      %p194 = por %p192, %p193
      %p196 = scmp.ne.s32.totalorder %s181, %s195
      %p197 = scmp.eq.s32.totalorder %s24, 0
      %p198 = por %p196, %p197
      %s200 = sadd.s32 %s199, 1
      %p203 = scmp.eq.s32.totalorder %s18, 1
      %p204 = scmp.ne.s32.totalorder %s199, %s201
      %p205 = scmp.eq.s32.totalorder %s18, 0
      %p206 = por %p204, %p205
      %p207 = scmp.ne.s32.totalorder %s199, %s201
      %p208 = scmp.eq.s32.totalorder %s23, 1
      %p209 = por %p207, %p208
      %p210 = scmp.ne.s32.totalorder %s201, %s202
      %p211 = scmp.eq.s32.totalorder %s23, 0
      %p212 = por %p210, %p211
      %p213 = scmp.ne.s32.totalorder %s201, %s202
      %p214 = scmp.eq.s32.totalorder %s24, 1
      %p215 = por %p213, %p214
      %p217 = scmp.ne.s32.totalorder %s202, %s216
      %p218 = scmp.eq.s32.totalorder %s24, 0
      %p219 = por %p217, %p218
      %s220 = ssub.s32 %s18, %s25
      %p221 = scmp.eq.s32.totalorder %s220, 0
      %s223 = sadd.s32 %s222, 1
      %s224 = scalar_select %p221, %s222, %s223
      %p227 = pneg %p221
      %p228 = scmp.eq.s32.totalorder %s18, 1
      %p229 = por %p227, %p228
      %p230 = scmp.ne.s32.totalorder %s222, %s225
      %p231 = scmp.eq.s32.totalorder %s18, 0
      %p232 = por %p230, %p231
      %p233 = scmp.ne.s32.totalorder %s222, %s225
      %p234 = scmp.eq.s32.totalorder %s23, 1
      %p235 = por %p233, %p234
      %p236 = scmp.ne.s32.totalorder %s225, %s226
      %p237 = scmp.eq.s32.totalorder %s23, 0
      %p238 = por %p236, %p237
      %p239 = scmp.ne.s32.totalorder %s225, %s226
      %p240 = scmp.eq.s32.totalorder %s24, 1
      %p241 = por %p239, %p240
      %p243 = scmp.ne.s32.totalorder %s226, %s242
      %p244 = scmp.eq.s32.totalorder %s24, 0
      %p245 = por %p243, %p244
      %p246 = scmp.le.s32.totalorder 1, %s18
      %p247 = scmp.lt.s32.totalorder %s18, 3
      %p248 = pnand %p246, %p247
      %p249 = pneg %p248
      // Predicated region
      $region9: #{scnn_fc_forward.1} parent=5 // pred_check
        _
      $region10: #{scnn_fc_forward.1} parent=5 // pred_check_branch
        %251 = sbr.rel (%p248) target = $region12
      $region11: #{scnn_fc_forward.1} parent=5 // pred_region
        %s252 = ssub.s32 %s18, 1
        // Predicated region
        $region13: #{scnn_fc_forward.1} parent=11 // pred_check
          %p253 = pneg %p65
        $region14: #{scnn_fc_forward.1} parent=11 // pred_check_branch
          %255 = sbr.rel (%p253) target = $region16
        $region15: #{scnn_fc_forward.1} parent=11 // pred_region
          _
        $region16: #{scnn_fc_forward.1} parent=11 // pred_fallthru
          _
        // Predicated region
        $region17: #{scnn_fc_forward.1} parent=11 // pred_check
          %p256 = pneg %p86
        $region18: #{scnn_fc_forward.1} parent=11 // pred_check_branch
          %258 = sbr.rel (%p256) target = $region20
        $region19: #{scnn_fc_forward.1} parent=11 // pred_region
          _
        $region20: #{scnn_fc_forward.1} parent=11 // pred_fallthru
          _
        // Predicated region
        $region21: #{scnn_fc_forward.1} parent=11 // pred_check
          %p259 = pneg %p107
        $region22: #{scnn_fc_forward.1} parent=11 // pred_check_branch
          %261 = sbr.rel (%p259) target = $region24
        $region23: #{scnn_fc_forward.1} parent=11 // pred_region
          _
        $region24: #{scnn_fc_forward.1} parent=11 // pred_fallthru
          _
        // Predicated region
        $region25: #{scnn_fc_forward.1} parent=11 // pred_check
          %p262 = pneg %p128
        $region26: #{scnn_fc_forward.1} parent=11 // pred_check_branch
          %264 = sbr.rel (%p262) target = $region28
        $region27: #{scnn_fc_forward.1} parent=11 // pred_region
          _
        $region28: #{scnn_fc_forward.1} parent=11 // pred_fallthru
          _
        // Predicated region
        $region29: #{scnn_fc_forward.1} parent=11 // pred_check
          %p265 = pneg %p149
        $region30: #{scnn_fc_forward.1} parent=11 // pred_check_branch
          %267 = sbr.rel (%p265) target = $region32
        $region31: #{scnn_fc_forward.1} parent=11 // pred_region
          _
        $region32: #{scnn_fc_forward.1} parent=11 // pred_fallthru
          _
        // Predicated region
        $region33: #{scnn_fc_forward.1} parent=11 // pred_check
          %p268 = pneg %p170
        $region34: #{scnn_fc_forward.1} parent=11 // pred_check_branch
          %270 = sbr.rel (%p268) target = $region36
        $region35: #{scnn_fc_forward.1} parent=11 // pred_region
          _
        $region36: #{scnn_fc_forward.1} parent=11 // pred_fallthru
          _
        // Predicated region
        $region37: #{scnn_fc_forward.1} parent=11 // pred_check
          %p271 = pneg %p191
        $region38: #{scnn_fc_forward.1} parent=11 // pred_check_branch
          %273 = sbr.rel (%p271) target = $region40
        $region39: #{scnn_fc_forward.1} parent=11 // pred_region
          _
        $region40: #{scnn_fc_forward.1} parent=11 // pred_fallthru
          _
        // Predicated region
        $region41: #{scnn_fc_forward.1} parent=11 // pred_check
          %p274 = pneg %p212
        $region42: #{scnn_fc_forward.1} parent=11 // pred_check_branch
          %276 = sbr.rel (%p274) target = $region44
        $region43: #{scnn_fc_forward.1} parent=11 // pred_region
          _
        $region44: #{scnn_fc_forward.1} parent=11 // pred_fallthru
          _
      $region12: #{scnn_fc_forward.1} parent=5 // pred_fallthru
        _
      %p277 = scmp.lt.s32.totalorder %s18, 2
      // Predicated region
      $region45: #{scnn_fc_forward.1} parent=5 // pred_check
        %p278 = pneg %p277
      $region46: #{scnn_fc_forward.1} parent=5 // pred_check_branch
        %280 = sbr.rel (%p278) target = $region48
      $region47: #{scnn_fc_forward.1} parent=5 // pred_region
        // Predicated region
        $region49: #{scnn_fc_forward.1} parent=47 // pred_check
          %p281 = pneg %p38
        $region50: #{scnn_fc_forward.1} parent=47 // pred_check_branch
          %283 = sbr.rel (%p281) target = $region52
        $region51: #{scnn_fc_forward.1} parent=47 // pred_region
          %p284 = scmp.lt.s32.totalorder %s18, 1
          %s285 = scalar_select %p284, %s18, 1
          %s286 = smul.addr %s285, 4
          %s287 = scalar_lea.vmem %s0, %s286
        $region52: #{scnn_fc_forward.1} parent=47 // pred_fallthru
          _
      $region48: #{scnn_fc_forward.1} parent=5 // pred_fallthru
        _
      %p288 = scmp.le.s32.totalorder 1, %s18
      %p289 = scmp.lt.s32.totalorder %s18, 3
      %p290 = pnand %p288, %p289
      %p291 = pneg %p290
      // Predicated region
      $region53: #{scnn_fc_forward.1} parent=5 // pred_check
        _
      $region54: #{scnn_fc_forward.1} parent=5 // pred_check_branch
        %293 = sbr.rel (%p290) target = $region56
      $region55: #{scnn_fc_forward.1} parent=5 // pred_region
        %s294 = ssub.s32 %s18, 1
        %p295 = scmp.lt.s32.totalorder %s23, 1
        %s296 = scalar_select %p295, %s23, 1
        %s297 = smul.addr %s296, 4
        %s298 = scalar_lea.vmem %s0, %s297
        %p299 = pneg %p44
        %p300 = pneg %p41
        %p301 = pneg %p65
        %p302 = pneg %p62
        %p303 = pneg %p86
        %p304 = pneg %p83
        %p305 = pneg %p107
        %p306 = pneg %p104
        %p307 = pneg %p128
        %p308 = pneg %p125
        %p309 = pneg %p149
        %p310 = pneg %p146
        %p311 = pneg %p170
        %p312 = pneg %p167
        %p313 = pneg %p191
        %p314 = pneg %p188
        %p315 = pneg %p212
        %p316 = pneg %p209
        %p317 = pneg %p238
        %p318 = pneg %p235
        %s319 = sand.u32 %s225, 1
        %s320 = scalar_lea.sflag [#allocation3], %s319
        %s321 = sand.u32 %s225, 1
        %s322 = scalar_lea.vmem [#allocation2], %s321
        %p323 = scmp.lt.s32.totalorder %s23, 1
        %s324 = scalar_select %p323, %s23, 1
        %s325 = smul.addr %s324, 4
        %s326 = scalar_lea.vmem %s0, %s325
        %v328 = vld [vmem:[%s326] sm:$0xf]
        %v329 = vld [vmem:[%s1] sm:$0xf]
        %v330 = vld [vmem:[%s1 + $0x4] sm:$0xf]
        %v331 = vpack.c.bf16 %v328, %v328
        %v334 = vunpack.c.l.b16 %v329
        %v335 = vunpack.c.l.b16 %v330
        %v336 = vpack.c.b16 %v335, %v334
        %vm337 = vcmask 31744
        %v339 = vsel %vm337, %v336, 0
        %vm341 = vcmask 1041408
        %v343 = vsel %vm341, %v331, 0
        %345 = vmatprep.subr.bf16.mxu0 0
        %346 = vmatpush1.bf16.msra.mxu0 %v343
        %347 = vmatprep.subr.bf16.mxu0 0
        %348 = vmatpush1.bf16.msra.mxu0 0
        %349 = vmatprep.subr.bf16.mxu0 0
        %350 = vmatpush1.bf16.msra.mxu0 0
        %351 = vmatprep.subr.bf16.mxu0 0
        %352 = vmatpush1.bf16.msra.mxu0 0
        %353 = vmatprep.subr.bf16.mxu0 0
        %354 = vmatpush1.bf16.msra.mxu0 0
        %355 = vmatprep.subr.bf16.mxu0 0
        %356 = vmatpush1.bf16.msra.mxu0 0
        %357 = vmatprep.subr.bf16.mxu0 0
        %358 = vmatpush1.bf16.msra.mxu0 0
        %359 = vmatprep.subr.bf16.mxu0 0
        %360 = vmatpush1.bf16.msra.mxu0 0
        %361 = vmatprep.subr.bf16.mxu0 0
        %362 = vmatpush1.bf16.msra.mxu0 0
        %363 = vmatprep.subr.bf16.mxu0 0
        %364 = vmatpush1.bf16.msra.mxu0 0
        %365 = vmatprep.subr.bf16.mxu0 0
        %366 = vmatpush1.bf16.msra.mxu0 0
        %367 = vmatprep.subr.bf16.mxu0 0
        %368 = vmatpush1.bf16.msra.mxu0 0
        %369 = vmatprep.subr.bf16.mxu0 0
        %370 = vmatpush1.bf16.msra.mxu0 0
        %371 = vmatprep.subr.bf16.mxu0 0
        %372 = vmatpush1.bf16.msra.mxu0 0
        %373 = vmatprep.subr.bf16.mxu0 0
        %374 = vmatpush1.bf16.msra.mxu0 0
        %375 = vmatprep.subr.bf16.mxu0 0
        %376 = vmatpush1.bf16.msra.mxu0 0
        %377 = vmatprep.mubr.bf16.mxu0 0
        %378 = vmatmul.mubr.bf16.gmra.mrb[0].mxu0 %v339
        %v379 = vpop.f32.mrb[0].mxu0
        %v380 = vadd.f32 0.0, %v379
        %v381 = vpop.f32.mrb[0].mxu0
        %v382 = vpop.f32.mrb[0].mxu0
        %v383 = vadd.f32 0.0, %v382
        %v384 = vpop.f32.mrb[0].mxu0
        %385 = vdwg.mxu0
        %v386 = vld [vmem:[%s2] sm:$0xff]
        %v387 = vld [vmem:[%s2 + $0x8] sm:$0xff]
        %v388 = vld [vmem:[%s3] sm:$0xff]
        %v389 = vld [vmem:[%s3 + $0x8] sm:$0xff]
        %v390 = vpack.c.bf16 %v383, %v380
        %392 = vrot.lane.b32.xlu0 %v390, 4
        %v393 = vpop.permute.xlu0 %392
        %v396 = vsel %vm337, 0, %v393
        %vm397 = vcmask 293888
        %v398 = vsel %vm397, %v396, 0
        %401 = vrot.lane.b32.xlu0 %v398, 127
        %v402 = vpop.permute.xlu0 %401
        %404 = vrot.lane.b32.xlu0 %v398, 126
        %v405 = vpop.permute.xlu0 %404
        %407 = vrot.lane.b32.xlu0 %v398, 125
        %v408 = vpop.permute.xlu0 %407
        %410 = vrot.lane.b32.xlu0 %v398, 124
        %v411 = vpop.permute.xlu0 %410
        %413 = vrot.lane.b32.xlu0 %v398, 123
        %v414 = vpop.permute.xlu0 %413
        %416 = vrot.lane.b32.xlu0 %v398, 122
        %v417 = vpop.permute.xlu0 %416
        %419 = vrot.lane.b32.xlu0 %v398, 121
        %v420 = vpop.permute.xlu0 %419
        %422 = vrot.lane.b32.xlu0 %v398, 120
        %v423 = vpop.permute.xlu0 %422
        %426 = vset.pattern.permute.xlu0 0
        %427 = vperm.xlu0 %426, %v388
        %v428 = vpop.permute.xlu0 %427
        %431 = vset.pattern.permute.xlu0 0
        %432 = vperm.xlu0 %431, %v389
        %v433 = vpop.permute.xlu0 %432
        %v437 = vunpack.c.l.b16 %v386
        %v438 = vunpack.c.h.b16 %v386
        %v439 = vunpack.c.l.b16 %v387
        %v440 = vunpack.c.h.b16 %v387
        %v441 = vpack.c.b16 %v439, %v437
        %v442 = vpack.c.b16 %v440, %v438
        %vm444 = vcmask 130048
        %v446 = vsel %vm444, %v442, 0
        %448 = vmatprep.subr.bf16.mxu0 0
        %449 = vmatpush1.bf16.msra.mxu0 %v398
        %450 = vmatprep.subr.bf16.mxu0 0
        %451 = vmatpush1.bf16.msra.mxu0 %v402
        %452 = vmatprep.subr.bf16.mxu0 0
        %453 = vmatpush1.bf16.msra.mxu0 %v405
        %454 = vmatprep.subr.bf16.mxu0 0
        %455 = vmatpush1.bf16.msra.mxu0 %v408
        %456 = vmatprep.subr.bf16.mxu0 0
        %457 = vmatpush1.bf16.msra.mxu0 %v411
        %458 = vmatprep.subr.bf16.mxu0 0
        %459 = vmatpush1.bf16.msra.mxu0 %v414
        %460 = vmatprep.subr.bf16.mxu0 0
        %461 = vmatpush1.bf16.msra.mxu0 %v417
        %462 = vmatprep.subr.bf16.mxu0 0
        %463 = vmatpush1.bf16.msra.mxu0 %v420
        %464 = vmatprep.subr.bf16.mxu0 0
        %465 = vmatpush1.bf16.msra.mxu0 %v423
        %466 = vmatprep.subr.bf16.mxu0 0
        %467 = vmatpush1.bf16.msra.mxu0 0
        %468 = vmatprep.subr.bf16.mxu0 0
        %469 = vmatpush1.bf16.msra.mxu0 0
        %470 = vmatprep.subr.bf16.mxu0 0
        %471 = vmatpush1.bf16.msra.mxu0 0
        %472 = vmatprep.subr.bf16.mxu0 0
        %473 = vmatpush1.bf16.msra.mxu0 0
        %474 = vmatprep.subr.bf16.mxu0 0
        %475 = vmatpush1.bf16.msra.mxu0 0
        %476 = vmatprep.subr.bf16.mxu0 0
        %477 = vmatpush1.bf16.msra.mxu0 0
        %478 = vmatprep.subr.bf16.mxu0 0
        %479 = vmatpush1.bf16.msra.mxu0 0
        %480 = vmatprep.mubr.bf16.mxu0 %v446
        %481 = vmatmul.mubr.bf16.gmra.mrb[0].mxu0 %v441
        %v482 = vpop.f32.mrb[0].mxu0
        %v483 = vadd.f32 %v428, %v482
        %v484 = vpop.f32.mrb[0].mxu0
        %v485 = vpop.f32.mrb[0].mxu0
        %v486 = vadd.f32 %v433, %v485
        %v487 = vpop.f32.mrb[0].mxu0
        %488 = vdwg.mxu0
        %v489 = vmax.f32 %v483, 0.0
        %v490 = vmax.f32 %v486, 0.0
        %v491 = vld [vmem:[%s4] sm:$0xf]
        %v492 = vld [vmem:[%s4 + $0x4] sm:$0xf]
        %v493 = vpack.c.bf16 %v490, %v489
        %v496 = vunpack.c.l.b16 %v491
        %v497 = vunpack.c.l.b16 %v492
        %v498 = vpack.c.b16 %v497, %v496
        %v500 = vsel %vm444, %v498, 0
        %502 = vmatprep.subr.bf16.mxu0 0
        %503 = vmatpush1.bf16.msra.mxu0 %v493
        %504 = vmatprep.subr.bf16.mxu0 0
        %505 = vmatpush1.bf16.msra.mxu0 0
        %506 = vmatprep.subr.bf16.mxu0 0
        %507 = vmatpush1.bf16.msra.mxu0 0
        %508 = vmatprep.subr.bf16.mxu0 0
        %509 = vmatpush1.bf16.msra.mxu0 0
        %510 = vmatprep.subr.bf16.mxu0 0
        %511 = vmatpush1.bf16.msra.mxu0 0
        %512 = vmatprep.subr.bf16.mxu0 0
        %513 = vmatpush1.bf16.msra.mxu0 0
        %514 = vmatprep.subr.bf16.mxu0 0
        %515 = vmatpush1.bf16.msra.mxu0 0
        %516 = vmatprep.subr.bf16.mxu0 0
        %517 = vmatpush1.bf16.msra.mxu0 0
        %518 = vmatprep.subr.bf16.mxu0 0
        %519 = vmatpush1.bf16.msra.mxu0 0
        %520 = vmatprep.subr.bf16.mxu0 0
        %521 = vmatpush1.bf16.msra.mxu0 0
        %522 = vmatprep.subr.bf16.mxu0 0
        %523 = vmatpush1.bf16.msra.mxu0 0
        %524 = vmatprep.subr.bf16.mxu0 0
        %525 = vmatpush1.bf16.msra.mxu0 0
        %526 = vmatprep.subr.bf16.mxu0 0
        %527 = vmatpush1.bf16.msra.mxu0 0
        %528 = vmatprep.subr.bf16.mxu0 0
        %529 = vmatpush1.bf16.msra.mxu0 0
        %530 = vmatprep.subr.bf16.mxu0 0
        %531 = vmatpush1.bf16.msra.mxu0 0
        %532 = vmatprep.subr.bf16.mxu0 0
        %533 = vmatpush1.bf16.msra.mxu0 0
        %534 = vmatprep.mubr.bf16.mxu0 0
        %535 = vmatmul.mubr.bf16.gmra.mrb[0].mxu0 %v500
        %v536 = vpop.f32.mrb[0].mxu0
        %v537 = vadd.f32 0.0, %v536
        %v538 = vpop.f32.mrb[0].mxu0
        %v539 = vpop.f32.mrb[0].mxu0
        %v540 = vadd.f32 0.0, %v539
        %v541 = vpop.f32.mrb[0].mxu0
        %542 = vdwg.mxu0
        %v543 = vld [vmem:[%s5] sm:$0xff]
        %v544 = vld [vmem:[%s5 + $0x8] sm:$0xff]
        %v545 = vld [vmem:[%s6] sm:$0xff]
        %v546 = vld [vmem:[%s6 + $0x8] sm:$0xff]
        %v547 = vpack.c.bf16 %v540, %v537
        %549 = vrot.lane.b32.xlu0 %v547, 4
        %v550 = vpop.permute.xlu0 %549
        %v552 = vsel %vm337, 0, %v550
        %v553 = vsel %vm397, %v552, 0
        %556 = vrot.lane.b32.xlu0 %v553, 127
        %v557 = vpop.permute.xlu0 %556
        %559 = vrot.lane.b32.xlu0 %v553, 126
        %v560 = vpop.permute.xlu0 %559
        %562 = vrot.lane.b32.xlu0 %v553, 125
        %v563 = vpop.permute.xlu0 %562
        %565 = vrot.lane.b32.xlu0 %v553, 124
        %v566 = vpop.permute.xlu0 %565
        %568 = vrot.lane.b32.xlu0 %v553, 123
        %v569 = vpop.permute.xlu0 %568
        %571 = vrot.lane.b32.xlu0 %v553, 122
        %v572 = vpop.permute.xlu0 %571
        %574 = vrot.lane.b32.xlu0 %v553, 121
        %v575 = vpop.permute.xlu0 %574
        %577 = vrot.lane.b32.xlu0 %v553, 120
        %v578 = vpop.permute.xlu0 %577
        %581 = vset.pattern.permute.xlu0 0
        %582 = vperm.xlu0 %581, %v545
        %v583 = vpop.permute.xlu0 %582
        %586 = vset.pattern.permute.xlu0 0
        %587 = vperm.xlu0 %586, %v546
        %v588 = vpop.permute.xlu0 %587
        %v592 = vunpack.c.l.b16 %v543
        %v593 = vunpack.c.h.b16 %v543
        %v594 = vunpack.c.l.b16 %v544
        %v595 = vunpack.c.h.b16 %v544
        %v596 = vpack.c.b16 %v594, %v592
        %v597 = vpack.c.b16 %v595, %v593
        %v600 = vsel %vm444, %v597, 0
        %602 = vmatprep.subr.bf16.mxu0 0
        %603 = vmatpush1.bf16.msra.mxu0 %v553
        %604 = vmatprep.subr.bf16.mxu0 0
        %605 = vmatpush1.bf16.msra.mxu0 %v557
        %606 = vmatprep.subr.bf16.mxu0 0
        %607 = vmatpush1.bf16.msra.mxu0 %v560
        %608 = vmatprep.subr.bf16.mxu0 0
        %609 = vmatpush1.bf16.msra.mxu0 %v563
        %610 = vmatprep.subr.bf16.mxu0 0
        %611 = vmatpush1.bf16.msra.mxu0 %v566
        %612 = vmatprep.subr.bf16.mxu0 0
        %613 = vmatpush1.bf16.msra.mxu0 %v569
        %614 = vmatprep.subr.bf16.mxu0 0
        %615 = vmatpush1.bf16.msra.mxu0 %v572
        %616 = vmatprep.subr.bf16.mxu0 0
        %617 = vmatpush1.bf16.msra.mxu0 %v575
        %618 = vmatprep.subr.bf16.mxu0 0
        %619 = vmatpush1.bf16.msra.mxu0 %v578
        %620 = vmatprep.subr.bf16.mxu0 0
        %621 = vmatpush1.bf16.msra.mxu0 0
        %622 = vmatprep.subr.bf16.mxu0 0
        %623 = vmatpush1.bf16.msra.mxu0 0
        %624 = vmatprep.subr.bf16.mxu0 0
        %625 = vmatpush1.bf16.msra.mxu0 0
        %626 = vmatprep.subr.bf16.mxu0 0
        %627 = vmatpush1.bf16.msra.mxu0 0
        %628 = vmatprep.subr.bf16.mxu0 0
        %629 = vmatpush1.bf16.msra.mxu0 0
        %630 = vmatprep.subr.bf16.mxu0 0
        %631 = vmatpush1.bf16.msra.mxu0 0
        %632 = vmatprep.subr.bf16.mxu0 0
        %633 = vmatpush1.bf16.msra.mxu0 0
        %634 = vmatprep.mubr.bf16.mxu0 %v600
        %635 = vmatmul.mubr.bf16.gmra.mrb[0].mxu0 %v596
        %v636 = vpop.f32.mrb[0].mxu0
        %v637 = vadd.f32 %v583, %v636
        %v638 = vpop.f32.mrb[0].mxu0
        %v639 = vpop.f32.mrb[0].mxu0
        %v640 = vadd.f32 %v588, %v639
        %v641 = vpop.f32.mrb[0].mxu0
        %642 = vdwg.mxu0
        %v643 = vmax.f32 %v637, 0.0
        %v644 = vmax.f32 %v640, 0.0
        %vm645 = vcmask 261120
        %v646 = vsel %vm645, %v643, 0.0
        %647 = vadd.xlane.f32.xlu0 %v646
        %v648 = vpop.xlane.xlu0 %647
        %v649 = vsel %vm645, %v644, 0.0
        %650 = vadd.xlane.f32.xlu0 %v649
        %v651 = vpop.xlane.xlu0 %650
        %v652 = vrcp.pop 32.0
        %v653 = vmul.f32 %v648, %v652
        %v654 = vmul.f32 %v651, %v652
        %655 = vxpose.xlu0.b32.start [1/16] %v653, 128
        %656 = vxpose.xlu0.b32.cont [2/16] %v654, 128
        %657 = vxpose.xlu0.b32.cont [3/16] 0.0, 128
        %658 = vxpose.xlu0.b32.cont [4/16] 0.0, 128
        %659 = vxpose.xlu0.b32.cont [5/16] 0.0, 128
        %660 = vxpose.xlu0.b32.cont [6/16] 0.0, 128
        %661 = vxpose.xlu0.b32.cont [7/16] 0.0, 128
        %662 = vxpose.xlu0.b32.cont [8/16] 0.0, 128
        %663 = vxpose.xlu0.b32.cont [9/16] 0.0, 128
        %664 = vxpose.xlu0.b32.cont [10/16] 0.0, 128
        %665 = vxpose.xlu0.b32.cont [11/16] 0.0, 128
        %666 = vxpose.xlu0.b32.cont [12/16] 0.0, 128
        %667 = vxpose.xlu0.b32.cont [13/16] 0.0, 128
        %668 = vxpose.xlu0.b32.cont [14/16] 0.0, 128
        %669 = vxpose.xlu0.b32.cont [15/16] 0.0, 128
        %670 = vxpose.xlu0.b32.end [16/16] 0.0, 128
        %v671 = vpop.trf.xlu0
        %v672 = vpop.trf.xlu0
        %v673 = vpop.trf.xlu0
        %v674 = vpop.trf.xlu0
        %v675 = vpop.trf.xlu0
        %v676 = vpop.trf.xlu0
        %v677 = vpop.trf.xlu0
        %v678 = vpop.trf.xlu0
        %v679 = vpop.trf.xlu0
        %v680 = vpop.trf.xlu0
        %v681 = vpop.trf.xlu0
        %v682 = vpop.trf.xlu0
        %v683 = vpop.trf.xlu0
        %v684 = vpop.trf.xlu0
        %v685 = vpop.trf.xlu0
        %v686 = vpop.trf.xlu0
        %v687 = vpack.c.bf16 %v671, %v671
        %v688 = vld [vmem:[%s7] sm:$0xf]
        %v689 = vld [vmem:[%s7 + $0x4] sm:$0xf]
        %v690 = vld [vmem:[%s8] sm:$0x1]
        %v693 = vunpack.c.l.b16 %v688
        %v694 = vunpack.c.l.b16 %v689
        %v695 = vpack.c.b16 %v694, %v693
        %v698 = vsel %vm444, %v687, 0
        %700 = vmatprep.subr.bf16.mxu0 0
        %701 = vmatpush1.bf16.msra.mxu0 %v695
        %702 = vmatprep.subr.bf16.mxu0 0
        %703 = vmatpush1.bf16.msra.mxu0 0
        %704 = vmatprep.subr.bf16.mxu0 0
        %705 = vmatpush1.bf16.msra.mxu0 0
        %706 = vmatprep.subr.bf16.mxu0 0
        %707 = vmatpush1.bf16.msra.mxu0 0
        %708 = vmatprep.subr.bf16.mxu0 0
        %709 = vmatpush1.bf16.msra.mxu0 0
        %710 = vmatprep.subr.bf16.mxu0 0
        %711 = vmatpush1.bf16.msra.mxu0 0
        %712 = vmatprep.subr.bf16.mxu0 0
        %713 = vmatpush1.bf16.msra.mxu0 0
        %714 = vmatprep.subr.bf16.mxu0 0
        %715 = vmatpush1.bf16.msra.mxu0 0
        %716 = vmatprep.subr.bf16.mxu0 0
        %717 = vmatpush1.bf16.msra.mxu0 0
        %718 = vmatprep.subr.bf16.mxu0 0
        %719 = vmatpush1.bf16.msra.mxu0 0
        %720 = vmatprep.subr.bf16.mxu0 0
        %721 = vmatpush1.bf16.msra.mxu0 0
        %722 = vmatprep.subr.bf16.mxu0 0
        %723 = vmatpush1.bf16.msra.mxu0 0
        %724 = vmatprep.subr.bf16.mxu0 0
        %725 = vmatpush1.bf16.msra.mxu0 0
        %726 = vmatprep.subr.bf16.mxu0 0
        %727 = vmatpush1.bf16.msra.mxu0 0
        %728 = vmatprep.subr.bf16.mxu0 0
        %729 = vmatpush1.bf16.msra.mxu0 0
        %730 = vmatprep.subr.bf16.mxu0 0
        %731 = vmatpush1.bf16.msra.mxu0 0
        %732 = vmatprep.mubr.bf16.mxu0 0
        %733 = vmatmul.mubr.bf16.gmra.mrb[0].mxu0 %v698
        %v734 = vpop.f32.mrb[0].mxu0
        %v735 = vadd.f32 %v690, %v734
        %v736 = vpop.f32.mrb[0].mxu0
        %v737 = vpop.f32.mrb[0].mxu0
        %v738 = vpop.f32.mrb[0].mxu0
        %739 = vdwg.mxu0
        %vm740 = vcmask 1040384
        %v741 = vsel %vm740, %v735, -inf
        %742 = vmax.xlane.f32.xlu0 %v741
        %v743 = vpop.xlane.xlu0 %742
        %v744 = vsub.f32 %v735, %v743
        %v745 = vmul.f32 %v744, 1.442695
        %v746 = vpow.pop %v745
        %v747 = vsel %vm740, %v746, 0.0
        %748 = vadd.xlane.f32.xlu0 %v747
        %v749 = vpop.xlane.xlu0 %748
        %v750 = vlog2.pop %v749
        %v751 = vmul.f32 %v750, 0.6931472
        %v752 = vadd.f32 %v743, %v751
        %v753 = vsub.f32 %v735, %v752
        %754 = vst [vmem:[%s322] sm:$0x1] %v753
        %s755 = sand.u32 %s225, 1
        %s756 = scalar_lea.sflag [#allocation3], %s755
        %s757 = sand.u32 %s225, 1
        %s758 = scalar_lea.vmem [#allocation2], %s757
        // Predicated region
        $region57: #{scnn_fc_forward.1} parent=55 // pred_check
          %p759 = pneg %p235
        $region58: #{scnn_fc_forward.1} parent=55 // pred_check_branch
          %761 = sbr.rel (%p759) target = $region60
        $region59: #{scnn_fc_forward.1} parent=55 // pred_region
          %s763 = ssub.s32 16, 16
          %764 = vsyncadd %s756, %s763
          %s765 = smul.addr %s23, 16
          %s766 = scalar_lea.hbm %s9, %s765
          %s768 = sshll.u32 %s758, 4
          %s769 = int_to_ptr.vmem [resolvable:$true] %s768
          %771 = dma.vmem_to_hbm [thread:$0]  %s769, 16, %s766, %s756
        $region60: #{scnn_fc_forward.1} parent=55 // pred_fallthru
          _
      $region56: #{scnn_fc_forward.1} parent=5 // pred_fallthru
        _
      %p772 = scmp.le.s32.totalorder 2, %s18
      // Predicated region
      $region61: #{scnn_fc_forward.1} parent=5 // pred_check
        %p773 = pneg %p772
      $region62: #{scnn_fc_forward.1} parent=5 // pred_check_branch
        %775 = sbr.rel (%p773) target = $region64
      $region63: #{scnn_fc_forward.1} parent=5 // pred_region
        %s776 = ssub.s32 %s18, 2
        // Predicated region
        $region65: #{scnn_fc_forward.1} parent=63 // pred_check
          %p777 = pneg %p241
        $region66: #{scnn_fc_forward.1} parent=63 // pred_check_branch
          %779 = sbr.rel (%p777) target = $region68
        $region67: #{scnn_fc_forward.1} parent=63 // pred_region
          %s780 = sand.u32 %s226, 1
          %s781 = scalar_lea.sflag [#allocation3], %s780
          %s782 = sand.u32 %s226, 1
          %s783 = scalar_lea.vmem [#allocation2], %s782
          %784 = dma.done %s781, 16
        $region68: #{scnn_fc_forward.1} parent=63 // pred_fallthru
          _
      $region64: #{scnn_fc_forward.1} parent=5 // pred_fallthru
        _
    $region6: #{scnn_fc_forward.1} parent=1 // loop_footer
      %s22 = sadd.s32 1, %s18
    $region7: #{scnn_fc_forward.1} parent=1 // loop_footer_branch
      %17 = sbr.rel target = $region3
    $region8: #{scnn_fc_forward.1} parent=1 // loop_exit
      _
    %785 = vsyncpa [#allocation3], 1
    %s786 = scalar_lea.sflag [#allocation3], 1
    %787 = vsyncpa %s786, 1

</llo_original>
